<compile_context>
chip_gen: v7x
topology: tpu7x:2x2x1
jax: 0.10.0
libtpu: 0.0.40
codegen_flags: <defaults>
</compile_context>

<pallas_src>
import math

import jax
import jax.numpy as jnp
from jax.experimental import pallas as pl
from jax.experimental.pallas import tpu as pltpu


def _round_up(x, m):
    return (x + m - 1) // m * m


# ----------------------------- Pallas kernels ------------------------------


def _g2f_prep_kernel(inp_ref, inpT_ref, nfh_row_ref, wT_ref, hp_ref, nwT_ref):
    """Per-batch (tiny) projections, hoisted out of the pixel loop.

    inp_ref:  (1, N, H)   inpT_ref: (1, H, N)
    nfh_row_ref: (1, H)   wT_ref:   (C, H)
    hp_ref:   (1, N, 1)   nwT_ref:  (1, C, N)
    """
    inp_b = inp_ref[0].astype(jnp.float32)                       # (N, H)
    # hid_proj[n] = sum_k input[n, k] * node_fea_for_hidden[k]   (lane reduce)
    hp_ref[0] = jnp.sum(inp_b * nfh_row_ref[...].astype(jnp.float32),
                        axis=1, keepdims=True)                   # (N, 1)
    # new_weight^T = weight^T @ input^T : (C, H) @ (H, N) -> (C, N)
    nwT_ref[0] = jnp.dot(wT_ref[...].astype(jnp.float32),
                         inpT_ref[0].astype(jnp.float32),
                         preferred_element_type=jnp.float32)     # (C, N)


def _g2f_pixels_kernel(hp_ref, nwT_ref, nfr_col_ref, res_ref, out_ref):
    """Streaming pixel-tile kernel (lane axis = pixels).

    hp_ref:  (1, N, 1)   nwT_ref: (1, C, N)   nfr_col_ref: (C, 1)
    res_ref / out_ref: (1, C, TP)
    """
    res_t = res_ref[0].astype(jnp.float32)                       # (C, TP)
    # per-pixel projection of the residual features (reduce over channels)
    res_proj = jnp.sum(res_t * nfr_col_ref[...].astype(jnp.float32),
                       axis=0, keepdims=True)                    # (1, TP)
    scores = hp_ref[0] + res_proj                                # (N, TP)
    # softmax over the node axis (sublanes)
    m = jnp.max(scores, axis=0, keepdims=True)
    e = jnp.exp(scores - m)
    s = jnp.sum(e, axis=0, keepdims=True)
    att = e / s                                                  # (N, TP)
    # (C, N) @ (N, TP) -> (C, TP); relu; lane-dense store
    out = jnp.dot(nwT_ref[0], att, preferred_element_type=jnp.float32)
    out_ref[0] = jnp.maximum(out, 0.0).astype(out_ref.dtype)


# ------------------------------ host wrapper -------------------------------


def graph_to_featuremaps_savemem(inp, res_feature, node_fea_for_res,
                                 node_fea_for_hidden, weight, *,
                                 tile_pixels=512):
    """Pallas implementation of Graph_to_Featuremaps_savemem.forward."""
    if inp.ndim == 3:            # torch code unsqueezes to (1, B, N, H)
        inp = inp[None]
    _, B, N, H = inp.shape
    Bi, C, h, w = res_feature.shape
    assert B == Bi
    Hw, C_out = weight.shape
    assert Hw == H
    assert C_out == C, "view(res_feature.size()) requires output_channels == input_channels"
    HW = h * w
    dtype = res_feature.dtype

    # pixel tiling: lane-dense (multiple of 128), padded HW sliced off afterwards
    TP = _round_up(min(tile_pixels, _round_up(HW, 128)), 128)
    HW_pad = _round_up(HW, TP)
    n_pt = HW_pad // TP

    inp_b = inp[0]                                     # (B, N, H)
    inpT = jnp.transpose(inp_b, (0, 2, 1))             # (B, H, N)  (tiny)
    wT = jnp.transpose(weight)                         # (C, H)
    nfr_col = node_fea_for_res.reshape(C, 1)           # (C, 1)
    nfh_row = node_fea_for_hidden.reshape(1, H)        # (1, H)

    res_flat = res_feature.reshape(B, C, HW)
    if HW_pad != HW:
        res_flat = jnp.pad(res_flat, ((0, 0), (0, 0), (0, HW_pad - HW)))

    # ---- stage 1: tiny per-batch projections (hoisted out of the pixel loop) ----
    hp, nwT = pl.pallas_call(
        _g2f_prep_kernel,
        out_shape=(jax.ShapeDtypeStruct((B, N, 1), jnp.float32),
                   jax.ShapeDtypeStruct((B, C, N), jnp.float32)),
        grid_spec=pltpu.PrefetchScalarGridSpec(
            num_scalar_prefetch=0,
            grid=(B,),
            in_specs=[
                pl.BlockSpec((1, N, H), lambda b: (b, 0, 0)),
                pl.BlockSpec((1, H, N), lambda b: (b, 0, 0)),
                pl.BlockSpec((1, H), lambda b: (0, 0)),
                pl.BlockSpec((C, H), lambda b: (0, 0)),
            ],
            out_specs=(pl.BlockSpec((1, N, 1), lambda b: (b, 0, 0)),
                       pl.BlockSpec((1, C, N), lambda b: (b, 0, 0))),
        ),
        compiler_params=pltpu.CompilerParams(
            dimension_semantics=("arbitrary",)),
    )(inp_b, inpT, nfh_row, wT)

    # ---- stage 2: streaming pixel-tile kernel -----------------------------------
    cost = pl.CostEstimate(
        flops=int(B * HW_pad * (2 * C + 2 * N * C + 6 * N + C)),
        transcendentals=int(B * HW_pad * N),
        bytes_accessed=int(4 * (2 * B * C * HW_pad + B * (N + C * N) + C)),
    )

    out_flat = pl.pallas_call(
        _g2f_pixels_kernel,
        out_shape=jax.ShapeDtypeStruct((B, C, HW_pad), dtype),
        grid_spec=pltpu.PrefetchScalarGridSpec(
            num_scalar_prefetch=0,
            grid=(B, n_pt),
            in_specs=[
                pl.BlockSpec((1, N, 1), lambda b, t: (b, 0, 0)),     # hid_proj
                pl.BlockSpec((1, C, N), lambda b, t: (b, 0, 0)),     # new_weight^T
                pl.BlockSpec((C, 1), lambda b, t: (0, 0)),           # node_fea_for_res
                pl.BlockSpec((1, C, TP), lambda b, t: (b, 0, t)),    # res_feature tile
            ],
            out_specs=pl.BlockSpec((1, C, TP), lambda b, t: (b, 0, t)),
        ),
        compiler_params=pltpu.CompilerParams(
            dimension_semantics=("parallel", "parallel"),
            vmem_limit_bytes=48 * 1024 * 1024,
        ),
        cost_estimate=cost,
    )(hp, nwT, nfr_col, res_flat)

    return out_flat[:, :, :HW].reshape(B, C, h, w)


# --------------------------- reference & init -------------------------------


def _reference_forward(inp, res_feature, node_fea_for_res, node_fea_for_hidden, weight):
    """Pure-JAX mirror of the PyTorch forward (for verification)."""
    B, C, h, w = res_feature.shape
    _, _, N, H = inp.shape
    HW = h * w
    inp_b = inp[0]                                               # (B, N, H)
    res_v = res_feature.reshape(B, C, HW).transpose(0, 2, 1)     # (B, HW, C)
    new_node1 = res_v @ node_fea_for_res                         # (B, HW, 1)
    new_node2 = inp_b @ node_fea_for_hidden                      # (B, N, 1)
    scores = new_node1[..., 0][:, :, None] + new_node2[..., 0][:, None, :]  # (B, HW, N)
    att = jax.nn.softmax(scores, axis=-1)
    new_weight = inp_b @ weight                                  # (B, N, C)
    feat = jnp.einsum('bpn,bnc->bpc', att, new_weight)           # (B, HW, C)
    out = feat.transpose(0, 2, 1).reshape(B, C, h, w)
    return jnp.maximum(out, 0.0)


def xavier_uniform(key, shape, dtype=jnp.float32):
    # torch.nn.init.xavier_uniform_ on a 2D (fan_out, fan_in) tensor
    fan_out, fan_in = shape
    bound = math.sqrt(6.0 / (fan_in + fan_out))
    return jax.random.uniform(key, shape, dtype=dtype, minval=-bound, maxval=bound)


# --------------------------------- main -------------------------------------


if __name__ == "__main__":
    key = jax.random.PRNGKey(0)
    k_inp, k_res, k_nfr, k_nfh, k_w = jax.random.split(key, 5)

    B = 2          # batch
    C = 4          # input_channels == output_channels
    h = w = 16     # spatial -> HW = 256 pixels
    N = 7          # nodes (module default)
    H = 32         # hidden_layers

    inp = jax.random.normal(k_inp, (1, B, N, H), dtype=jnp.float32)
    res_feature = jax.random.normal(k_res, (B, C, h, w), dtype=jnp.float32)
    node_fea_for_res = xavier_uniform(k_nfr, (C, 1))
    node_fea_for_hidden = xavier_uniform(k_nfh, (H, 1))
    weight = xavier_uniform(k_w, (H, C))

    out = graph_to_featuremaps_savemem(inp, res_feature, node_fea_for_res,
                                       node_fea_for_hidden, weight)
    out = jax.block_until_ready(out)

    ref = _reference_forward(inp, res_feature, node_fea_for_res,
                             node_fea_for_hidden, weight)
    assert out.shape == res_feature.shape
    max_err = float(jnp.max(jnp.abs(out - ref)))
    assert jnp.allclose(out, ref, atol=1e-4, rtol=1e-4), max_err

    print("KERNEL_OK")
</pallas_src>

<mosaic_0001>
module attributes {stable_mosaic.version = 11 : i64} {
  func.func @_g2f_prep_kernel(%arg0: i32, %arg1: memref<1x7x32xf32, #tpu.memory_space<vmem>>, %arg2: memref<1x32x7xf32, #tpu.memory_space<vmem>>, %arg3: memref<1x32xf32, #tpu.memory_space<vmem>>, %arg4: memref<4x32xf32, #tpu.memory_space<vmem>>, %arg5: memref<1x7x1xf32, #tpu.memory_space<vmem>>, %arg6: memref<1x4x7xf32, #tpu.memory_space<vmem>>) attributes {dimension_semantics = [#tpu.dimension_semantics<arbitrary>], iteration_bounds = array<i64: 2>, scalar_prefetch = 0 : i64, scratch_operands = 0 : i64, tpu.core_type = #tpu.core_type<tc>, window_params = [{transform_indices = @transform_0, window_bounds = array<i64: 1, 7, 32>}, {transform_indices = @transform_1, window_bounds = array<i64: 1, 32, 7>}, {pipeline_mode = #tpu.pipeline_mode<synchronous>, transform_indices = @transform_2, window_bounds = array<i64: 1, 32>}, {pipeline_mode = #tpu.pipeline_mode<synchronous>, transform_indices = @transform_3, window_bounds = array<i64: 4, 32>}, {transform_indices = @transform_4, window_bounds = array<i64: 1, 7, 1>}, {transform_indices = @transform_5, window_bounds = array<i64: 1, 4, 7>}]} {
    %c0 = arith.constant 0 : index
    %c0_0 = arith.constant 0 : index
    %c0_1 = arith.constant 0 : index
    %0 = vector.load %arg1[%c0, %c0_0, %c0_1] : memref<1x7x32xf32, #tpu.memory_space<vmem>>, vector<1x7x32xf32>
    %1 = vector.shape_cast %0 : vector<1x7x32xf32> to vector<7x32xf32>
    %c0_2 = arith.constant 0 : index
    %c0_3 = arith.constant 0 : index
    %2 = vector.load %arg3[%c0_2, %c0_3] : memref<1x32xf32, #tpu.memory_space<vmem>>, vector<1x32xf32>
    %3 = vector.broadcast %2 : vector<1x32xf32> to vector<7x32xf32>
    %4 = arith.mulf %1, %3 : vector<7x32xf32>
    %cst = arith.constant dense<0.000000e+00> : vector<7xf32>
    %5 = vector.multi_reduction <add>, %4, %cst [1] : vector<7x32xf32> to vector<7xf32>
    %6 = vector.shape_cast %5 : vector<7xf32> to vector<7x1xf32>
    %c0_4 = arith.constant 0 : index
    %c0_5 = arith.constant 0 : index
    %c0_6 = arith.constant 0 : index
    %7 = vector.load %arg5[%c0_4, %c0_5, %c0_6] : memref<1x7x1xf32, #tpu.memory_space<vmem>>, vector<1x7x1xf32>
    %8 = vector.shape_cast %7 : vector<1x7x1xf32> to vector<7x1xf32>
    %9 = vector.shape_cast %6 : vector<7x1xf32> to vector<1x7x1xf32>
    tpu.vector_store %arg5[%c0_4, %c0_5, %c0_6], %9 {strides = array<i32>} : memref<1x7x1xf32, #tpu.memory_space<vmem>>, vector<1x7x1xf32>,
    %c0_7 = arith.constant 0 : index
    %c0_8 = arith.constant 0 : index
    %10 = vector.load %arg4[%c0_7, %c0_8] : memref<4x32xf32, #tpu.memory_space<vmem>>, vector<4x32xf32>
    %c0_9 = arith.constant 0 : index
    %c0_10 = arith.constant 0 : index
    %c0_11 = arith.constant 0 : index
    %11 = vector.load %arg2[%c0_9, %c0_10, %c0_11] : memref<1x32x7xf32, #tpu.memory_space<vmem>>, vector<1x32x7xf32>
    %12 = vector.shape_cast %11 : vector<1x32x7xf32> to vector<32x7xf32>
    %cst_12 = arith.constant dense<0.000000e+00> : vector<4x7xf32>
    %13 = tpu.matmul %10, %12, %cst_12 {dimension_numbers = #tpu.dot_dimension_numbers<[1], [0], [0], [1], [0, 0, 1, 1], [], []>} : vector<4x32xf32>, vector<32x7xf32>, vector<4x7xf32> -> vector<4x7xf32>
    %c0_13 = arith.constant 0 : index
    %c0_14 = arith.constant 0 : index
    %c0_15 = arith.constant 0 : index
    %14 = vector.load %arg6[%c0_13, %c0_14, %c0_15] : memref<1x4x7xf32, #tpu.memory_space<vmem>>, vector<1x4x7xf32>
    %15 = vector.shape_cast %14 : vector<1x4x7xf32> to vector<4x7xf32>
    %16 = vector.shape_cast %13 : vector<4x7xf32> to vector<1x4x7xf32>
    tpu.vector_store %arg6[%c0_13, %c0_14, %c0_15], %16 {strides = array<i32>} : memref<1x4x7xf32, #tpu.memory_space<vmem>>, vector<1x4x7xf32>,
    return
  }
  func.func @transform_0(%arg0: i32) -> (i32, i32, i32) {
    %c0_i32 = arith.constant 0 : i32
    %c0_i32_0 = arith.constant 0 : i32
    %c0_i32_1 = arith.constant 0 : i32
    return %arg0, %c0_i32, %c0_i32_0 : i32, i32, i32
  }
  func.func @transform_1(%arg0: i32) -> (i32, i32, i32) {
    %c0_i32 = arith.constant 0 : i32
    %c0_i32_0 = arith.constant 0 : i32
    %c0_i32_1 = arith.constant 0 : i32
    return %arg0, %c0_i32, %c0_i32_0 : i32, i32, i32
  }
  func.func @transform_2(%arg0: i32) -> (i32, i32) {
    %c0_i32 = arith.constant 0 : i32
    %c0_i32_0 = arith.constant 0 : i32
    %c0_i32_1 = arith.constant 0 : i32
    return %c0_i32, %c0_i32_0 : i32, i32
  }
  func.func @transform_3(%arg0: i32) -> (i32, i32) {
    %c0_i32 = arith.constant 0 : i32
    %c0_i32_0 = arith.constant 0 : i32
    %c0_i32_1 = arith.constant 0 : i32
    return %c0_i32, %c0_i32_0 : i32, i32
  }
  func.func @transform_4(%arg0: i32) -> (i32, i32, i32) {
    %c0_i32 = arith.constant 0 : i32
    %c0_i32_0 = arith.constant 0 : i32
    %c0_i32_1 = arith.constant 0 : i32
    return %arg0, %c0_i32, %c0_i32_0 : i32, i32, i32
  }
  func.func @transform_5(%arg0: i32) -> (i32, i32, i32) {
    %c0_i32 = arith.constant 0 : i32
    %c0_i32_0 = arith.constant 0 : i32
    %c0_i32_1 = arith.constant 0 : i32
    return %arg0, %c0_i32, %c0_i32_0 : i32, i32, i32
  }
}

</mosaic_0001>

<llo_original>
// kernel: tpu_custom_call.1
$region0: #{tpu_custom_call.1}
  #allocation0 [shape = 'u32[]', space=smem, size = 0x4, offset = 0x4, fixed_abs, tag = 'smem constant byte address 0x4 - core index']
  #allocation1 [shape = 'u32[144,128]{1,0:T(1,128)}', space=vmem, size = 0x12000, scoped, tag = 'internal scratch']
  %s0 = inlined_call_operand.vmem [shape: f32[2,7,32], index: 0, kind: input, shape index: {}]
  %s1 = inlined_call_operand.vmem [shape: f32[2,32,7], index: 1, kind: input, shape index: {}]
  %s2 = inlined_call_operand.vmem [shape: f32[1,32], index: 2, kind: input, shape index: {}]
  %s3 = inlined_call_operand.vmem [shape: f32[4,32], index: 3, kind: input, shape index: {}]
  %s4 = inlined_call_operand.vmem [shape: f32[2,7,1], index: 4, kind: output, shape index: {0}]
  %s5 = inlined_call_operand.hbm [shape: f32[2,4,7], index: 5, kind: output, shape index: {1}]
  %6 = xla_tuple %s4, %s5
  %s7 = sld [smem:[#allocation0]]
  $region57: #{tpu_custom_call.1} parent=0
    _
  %s9 = ssub.s32 1, %s7
  %s10 = scalar_select 0, %s9, %s7
  $region1: #{tpu_custom_call.1} parent=0
    #allocation2 [shape = 'u8[4096]{0}', space=vmem, size = 0x1000, scoped, tag = 'output window, operand 1']
    #allocation3 [shape = 's32[2]{0}', space=sflag, size = 0x8, scoped, tag = 'scoped memory for tpu_custom_call.1']
    %11 = vsyncpa [#allocation3], 0
    %s12 = scalar_lea.sflag [#allocation3], 1
    %13 = vsyncpa %s12, 0
    loop: start=0, step=1, limit=4
    $region2: #{tpu_custom_call.1} parent=1 // loop_pre_header
      _
    $region3: #{tpu_custom_call.1} parent=1 // loop_header
      %s15 = sphi 0, %s19
      %p16 = scmp.ge.s32.totalorder %s15, 4
      %s25 = sphi 0, %s27
      %s28 = sphi 0, %s25
      %s29 = sphi 0, %s28
      %s45 = sphi 0, %s29
      %s51 = sphi 0, %s53
      %s54 = sphi 0, %s51
      %s55 = sphi 0, %s54
      %s71 = sphi 0, %s55
      %s75 = sphi 0, %s75
      %s77 = sphi 0, %s75
      %s78 = sphi 0, %s77
      %s92 = sphi 0, %s78
      %s96 = sphi 0, %s96
      %s98 = sphi 0, %s96
      %s99 = sphi 0, %s98
      %s113 = sphi 0, %s99
      %s119 = sphi 0, %s121
      %s122 = sphi 0, %s119
      %s123 = sphi 0, %s122
      %s139 = sphi 0, %s123
      %s145 = sphi 0, %s147
      %s148 = sphi 0, %s145
      %s149 = sphi 0, %s148
      %s165 = sphi 0, %s149
    $region4: #{tpu_custom_call.1} parent=1 // loop_header_branch
      %18 = sbr.rel (%p16) target = $region8
    $region5: #{tpu_custom_call.1} parent=1 // loop_body
      %s20 = ssub.s32 %s15, 1
      %s21 = ssub.s32 %s15, 2
      %s22 = sadd.s32 %s15, 1
      %s23 = ssub.s32 %s15, %s22
      %p24 = scmp.eq.s32.totalorder %s23, 0
      %s26 = sadd.s32 %s25, 1
      %s27 = scalar_select %p24, %s25, %s26
      %p30 = pneg %p24
      %p31 = scmp.eq.s32.totalorder %s15, 1
      %p32 = por %p30, %p31
      %p33 = scmp.ne.s32.totalorder %s25, %s28
      %p34 = scmp.eq.s32.totalorder %s15, 0
      %p35 = por %p33, %p34
      %p36 = scmp.ne.s32.totalorder %s25, %s28
      %p37 = scmp.eq.s32.totalorder %s20, 1
      %p38 = por %p36, %p37
      %p39 = scmp.ne.s32.totalorder %s28, %s29
      %p40 = scmp.eq.s32.totalorder %s20, 0
      %p41 = por %p39, %p40
      %p42 = scmp.ne.s32.totalorder %s28, %s29
      %p43 = scmp.eq.s32.totalorder %s21, 1
      %p44 = por %p42, %p43
      %p46 = scmp.ne.s32.totalorder %s29, %s45
      %p47 = scmp.eq.s32.totalorder %s21, 0
      %p48 = por %p46, %p47
      %s49 = ssub.s32 %s15, %s22
      %p50 = scmp.eq.s32.totalorder %s49, 0
      %s52 = sadd.s32 %s51, 1
      %s53 = scalar_select %p50, %s51, %s52
      %p56 = pneg %p50
      %p57 = scmp.eq.s32.totalorder %s15, 1
      %p58 = por %p56, %p57
      %p59 = scmp.ne.s32.totalorder %s51, %s54
      %p60 = scmp.eq.s32.totalorder %s15, 0
      %p61 = por %p59, %p60
      %p62 = scmp.ne.s32.totalorder %s51, %s54
      %p63 = scmp.eq.s32.totalorder %s20, 1
      %p64 = por %p62, %p63
      %p65 = scmp.ne.s32.totalorder %s54, %s55
      %p66 = scmp.eq.s32.totalorder %s20, 0
      %p67 = por %p65, %p66
      %p68 = scmp.ne.s32.totalorder %s54, %s55
      %p69 = scmp.eq.s32.totalorder %s21, 1
      %p70 = por %p68, %p69
      %p72 = scmp.ne.s32.totalorder %s55, %s71
      %p73 = scmp.eq.s32.totalorder %s21, 0
      %p74 = por %p72, %p73
      %s76 = sadd.s32 %s75, 1
      %p79 = scmp.eq.s32.totalorder %s15, 1
      %p80 = scmp.ne.s32.totalorder %s75, %s77
      %p81 = scmp.eq.s32.totalorder %s15, 0
      %p82 = por %p80, %p81
      %p83 = scmp.ne.s32.totalorder %s75, %s77
      %p84 = scmp.eq.s32.totalorder %s20, 1
      %p85 = por %p83, %p84
      %p86 = scmp.ne.s32.totalorder %s77, %s78
      %p87 = scmp.eq.s32.totalorder %s20, 0
      %p88 = por %p86, %p87
      %p89 = scmp.ne.s32.totalorder %s77, %s78
      %p90 = scmp.eq.s32.totalorder %s21, 1
      %p91 = por %p89, %p90
      %p93 = scmp.ne.s32.totalorder %s78, %s92
      %p94 = scmp.eq.s32.totalorder %s21, 0
      %p95 = por %p93, %p94
      %s97 = sadd.s32 %s96, 1
      %p100 = scmp.eq.s32.totalorder %s15, 1
      %p101 = scmp.ne.s32.totalorder %s96, %s98
      %p102 = scmp.eq.s32.totalorder %s15, 0
      %p103 = por %p101, %p102
      %p104 = scmp.ne.s32.totalorder %s96, %s98
      %p105 = scmp.eq.s32.totalorder %s20, 1
      %p106 = por %p104, %p105
      %p107 = scmp.ne.s32.totalorder %s98, %s99
      %p108 = scmp.eq.s32.totalorder %s20, 0
      %p109 = por %p107, %p108
      %p110 = scmp.ne.s32.totalorder %s98, %s99
      %p111 = scmp.eq.s32.totalorder %s21, 1
      %p112 = por %p110, %p111
      %p114 = scmp.ne.s32.totalorder %s99, %s113
      %p115 = scmp.eq.s32.totalorder %s21, 0
      %p116 = por %p114, %p115
      %s117 = ssub.s32 %s15, %s22
      %p118 = scmp.eq.s32.totalorder %s117, 0
      %s120 = sadd.s32 %s119, 1
      %s121 = scalar_select %p118, %s119, %s120
      %p124 = pneg %p118
      %p125 = scmp.eq.s32.totalorder %s15, 1
      %p126 = por %p124, %p125
      %p127 = scmp.ne.s32.totalorder %s119, %s122
      %p128 = scmp.eq.s32.totalorder %s15, 0
      %p129 = por %p127, %p128
      %p130 = scmp.ne.s32.totalorder %s119, %s122
      %p131 = scmp.eq.s32.totalorder %s20, 1
      %p132 = por %p130, %p131
      %p133 = scmp.ne.s32.totalorder %s122, %s123
      %p134 = scmp.eq.s32.totalorder %s20, 0
      %p135 = por %p133, %p134
      %p136 = scmp.ne.s32.totalorder %s122, %s123
      %p137 = scmp.eq.s32.totalorder %s21, 1
      %p138 = por %p136, %p137
      %p140 = scmp.ne.s32.totalorder %s123, %s139
      %p141 = scmp.eq.s32.totalorder %s21, 0
      %p142 = por %p140, %p141
      %s143 = ssub.s32 %s15, %s22
      %p144 = scmp.eq.s32.totalorder %s143, 0
      %s146 = sadd.s32 %s145, 1
      %s147 = scalar_select %p144, %s145, %s146
      %p150 = pneg %p144
      %p151 = scmp.eq.s32.totalorder %s15, 1
      %p152 = por %p150, %p151
      %p153 = scmp.ne.s32.totalorder %s145, %s148
      %p154 = scmp.eq.s32.totalorder %s15, 0
      %p155 = por %p153, %p154
      %p156 = scmp.ne.s32.totalorder %s145, %s148
      %p157 = scmp.eq.s32.totalorder %s20, 1
      %p158 = por %p156, %p157
      %p159 = scmp.ne.s32.totalorder %s148, %s149
      %p160 = scmp.eq.s32.totalorder %s20, 0
      %p161 = por %p159, %p160
      %p162 = scmp.ne.s32.totalorder %s148, %s149
      %p163 = scmp.eq.s32.totalorder %s21, 1
      %p164 = por %p162, %p163
      %p166 = scmp.ne.s32.totalorder %s149, %s165
      %p167 = scmp.eq.s32.totalorder %s21, 0
      %p168 = por %p166, %p167
      %p169 = scmp.le.s32.totalorder 1, %s15
      %p170 = scmp.lt.s32.totalorder %s15, 3
      %p171 = pnand %p169, %p170
      %p172 = pneg %p171
      // Predicated region
      $region9: #{tpu_custom_call.1} parent=5 // pred_check
        _
      $region10: #{tpu_custom_call.1} parent=5 // pred_check_branch
        %174 = sbr.rel (%p171) target = $region12
      $region11: #{tpu_custom_call.1} parent=5 // pred_region
        %s175 = ssub.s32 %s15, 1
        // Predicated region
        $region13: #{tpu_custom_call.1} parent=11 // pred_check
          %p176 = pneg %p88
        $region14: #{tpu_custom_call.1} parent=11 // pred_check_branch
          %178 = sbr.rel (%p176) target = $region16
        $region15: #{tpu_custom_call.1} parent=11 // pred_region
          _
        $region16: #{tpu_custom_call.1} parent=11 // pred_fallthru
          _
        // Predicated region
        $region17: #{tpu_custom_call.1} parent=11 // pred_check
          %p179 = pneg %p109
        $region18: #{tpu_custom_call.1} parent=11 // pred_check_branch
          %181 = sbr.rel (%p179) target = $region20
        $region19: #{tpu_custom_call.1} parent=11 // pred_region
          _
        $region20: #{tpu_custom_call.1} parent=11 // pred_fallthru
          _
      $region12: #{tpu_custom_call.1} parent=5 // pred_fallthru
        _
      %p182 = scmp.lt.s32.totalorder %s15, 2
      // Predicated region
      $region21: #{tpu_custom_call.1} parent=5 // pred_check
        %p183 = pneg %p182
      $region22: #{tpu_custom_call.1} parent=5 // pred_check_branch
        %185 = sbr.rel (%p183) target = $region24
      $region23: #{tpu_custom_call.1} parent=5 // pred_region
        // Predicated region
        $region25: #{tpu_custom_call.1} parent=23 // pred_check
          %p186 = pneg %p35
        $region26: #{tpu_custom_call.1} parent=23 // pred_check_branch
          %188 = sbr.rel (%p186) target = $region28
        $region27: #{tpu_custom_call.1} parent=23 // pred_region
          %p189 = scmp.lt.s32.totalorder %s15, 1
          %s190 = scalar_select %p189, %s15, 1
          %s191 = smul.addr %s190, 8
          %s192 = scalar_lea.vmem %s0, %s191
        $region28: #{tpu_custom_call.1} parent=23 // pred_fallthru
          _
        // Predicated region
        $region29: #{tpu_custom_call.1} parent=23 // pred_check
          %p193 = pneg %p61
        $region30: #{tpu_custom_call.1} parent=23 // pred_check_branch
          %195 = sbr.rel (%p193) target = $region32
        $region31: #{tpu_custom_call.1} parent=23 // pred_region
          %p196 = scmp.lt.s32.totalorder %s15, 1
          %s197 = scalar_select %p196, %s15, 1
          %s198 = smul.addr %s197, 4
          %s199 = smul.addr %s198, 8
          %s200 = scalar_lea.vmem %s1, %s199
        $region32: #{tpu_custom_call.1} parent=23 // pred_fallthru
          _
      $region24: #{tpu_custom_call.1} parent=5 // pred_fallthru
        _
      %p201 = scmp.le.s32.totalorder 1, %s15
      %p202 = scmp.lt.s32.totalorder %s15, 3
      %p203 = pnand %p201, %p202
      %p204 = pneg %p203
      // Predicated region
      $region33: #{tpu_custom_call.1} parent=5 // pred_check
        _
      $region34: #{tpu_custom_call.1} parent=5 // pred_check_branch
        %206 = sbr.rel (%p203) target = $region36
      $region35: #{tpu_custom_call.1} parent=5 // pred_region
        %s207 = ssub.s32 %s15, 1
        %p208 = scmp.lt.s32.totalorder %s20, 1
        %s209 = scalar_select %p208, %s20, 1
        %s210 = smul.addr %s209, 8
        %s211 = scalar_lea.vmem %s0, %s210
        %p212 = pneg %p41
        %p213 = pneg %p38
        %p214 = scmp.lt.s32.totalorder %s20, 1
        %s215 = scalar_select %p214, %s20, 1
        %s216 = smul.addr %s215, 4
        %s217 = smul.addr %s216, 8
        %s218 = scalar_lea.vmem %s1, %s217
        %p219 = pneg %p67
        %p220 = pneg %p64
        %p221 = pneg %p88
        %p222 = pneg %p85
        %p223 = pneg %p109
        %p224 = pneg %p106
        %p225 = pneg %p135
        %p226 = pneg %p132
        %p227 = scmp.lt.s32.totalorder %s20, 1
        %s228 = scalar_select %p227, %s20, 1
        %s229 = smul.addr %s228, 8
        %s230 = scalar_lea.vmem %s4, %s229
        %p231 = pneg %p161
        %p232 = pneg %p158
        %s233 = sand.u32 %s148, 1
        %s234 = scalar_lea.sflag [#allocation3], %s233
        %s235 = sand.u32 %s148, 1
        %s236 = smul.addr %s235, 4
        %s237 = scalar_lea.vmem [#allocation2], %s236
        %p238 = scmp.lt.s32.totalorder %s20, 1
        %s239 = scalar_select %p238, %s20, 1
        %s240 = smul.addr %s239, 8
        %s241 = scalar_lea.vmem %s0, %s240
        %p242 = scmp.lt.s32.totalorder %s20, 1
        %s243 = scalar_select %p242, %s20, 1
        %s244 = smul.addr %s243, 4
        %s245 = smul.addr %s244, 8
        %s246 = scalar_lea.vmem %s1, %s245
        %p247 = scmp.lt.s32.totalorder %s20, 1
        %s248 = scalar_select %p247, %s20, 1
        %s249 = smul.addr %s248, 8
        %s250 = scalar_lea.vmem %s4, %s249
        %v251 = vld [vmem:[%s241] sm:$0x7f]
        %v252 = vld [vmem:[%s2] sm:$0x1]
        %v254 = vlaneseq
        %v255 = vshrl.u32 %v254, 7
        %v256 = vsub.s32 0, %v255
        %v257 = vrot.slane %v252, %v256
        %v259 = vmul.f32 %v251, %v257
        %vm260 = vcmask 260096
        %v261 = vsel %vm260, %v259, 0.0
        %262 = vadd.xlane.f32.xlu0 %v261
        %v263 = vpop.xlane.xlu0 %262
        %vm264 = vcmask 6144
        %265 = vst.msk [vmem:[%s250] sm:$0x7f] %vm264, %v263
        %v266 = vld [vmem:[%s3] sm:$0xf]
        %v267 = vld [vmem:[%s246] sm:$0xff]
        %v268 = vld [vmem:[%s246 + $0x8] sm:$0xff]
        %v269 = vld [vmem:[%s246 + $0x10] sm:$0xff]
        %v270 = vld [vmem:[%s246 + $0x18] sm:$0xff]
        %vm271 = vcmask 261120
        %v273 = vsel %vm271, %v266, 0
        %275 = vmatprep.subr.mxu0 0.0
        %276 = vmatpush1.msra.mxu0 %v267
        %277 = vmatprep.subr.mxu0 0.0
        %278 = vmatpush1.msra.mxu0 %v268
        %279 = vmatprep.subr.mxu0 0.0
        %280 = vmatpush1.msra.mxu0 %v269
        %281 = vmatprep.subr.mxu0 0.0
        %282 = vmatpush1.msra.mxu0 %v270
        %283 = vmatprep.subr.mxu0 0.0
        %284 = vmatpush1.msra.mxu0 0.0
        %285 = vmatprep.subr.mxu0 0.0
        %286 = vmatpush1.msra.mxu0 0.0
        %287 = vmatprep.subr.mxu0 0.0
        %288 = vmatpush1.msra.mxu0 0.0
        %289 = vmatprep.subr.mxu0 0.0
        %290 = vmatpush1.msra.mxu0 0.0
        %291 = vmatprep.subr.mxu0 0.0
        %292 = vmatpush1.msra.mxu0 0.0
        %293 = vmatprep.subr.mxu0 0.0
        %294 = vmatpush1.msra.mxu0 0.0
        %295 = vmatprep.subr.mxu0 0.0
        %296 = vmatpush1.msra.mxu0 0.0
        %297 = vmatprep.subr.mxu0 0.0
        %298 = vmatpush1.msra.mxu0 0.0
        %299 = vmatprep.subr.mxu0 0.0
        %300 = vmatpush1.msra.mxu0 0.0
        %301 = vmatprep.subr.mxu0 0.0
        %302 = vmatpush1.msra.mxu0 0.0
        %303 = vmatprep.subr.mxu0 0.0
        %304 = vmatpush1.msra.mxu0 0.0
        %305 = vmatprep.subr.mxu0 0.0
        %306 = vmatpush1.msra.mxu0 0.0
        %307 = vmatprep.subr.mxu0 0.0
        %308 = vmatpush1.msra.mxu0 0.0
        %309 = vmatprep.subr.mxu0 0.0
        %310 = vmatpush1.msra.mxu0 0.0
        %311 = vmatprep.subr.mxu0 0.0
        %312 = vmatpush1.msra.mxu0 0.0
        %313 = vmatprep.subr.mxu0 0.0
        %314 = vmatpush1.msra.mxu0 0.0
        %315 = vmatprep.subr.mxu0 0.0
        %316 = vmatpush1.msra.mxu0 0.0
        %317 = vmatprep.subr.mxu0 0.0
        %318 = vmatpush1.msra.mxu0 0.0
        %319 = vmatprep.subr.mxu0 0.0
        %320 = vmatpush1.msra.mxu0 0.0
        %321 = vmatprep.subr.mxu0 0.0
        %322 = vmatpush1.msra.mxu0 0.0
        %323 = vmatprep.subr.mxu0 0.0
        %324 = vmatpush1.msra.mxu0 0.0
        %325 = vmatprep.subr.mxu0 0.0
        %326 = vmatpush1.msra.mxu0 0.0
        %327 = vmatprep.subr.mxu0 0.0
        %328 = vmatpush1.msra.mxu0 0.0
        %329 = vmatprep.subr.mxu0 0.0
        %330 = vmatpush1.msra.mxu0 0.0
        %331 = vmatprep.subr.mxu0 0.0
        %332 = vmatpush1.msra.mxu0 0.0
        %333 = vmatprep.subr.mxu0 0.0
        %334 = vmatpush1.msra.mxu0 0.0
        %335 = vmatprep.subr.mxu0 0.0
        %336 = vmatpush1.msra.mxu0 0.0
        %337 = vmatprep.subr.mxu0 0.0
        %338 = vmatpush1.msra.mxu0 0.0
        %339 = vmatprep.mubr.f32.mxu0 0.0
        %340 = vmatmul.mubr.f32.gmra.mrb[0].mxu0 %v273
        %v341 = vpop.f32.mrb[0].mxu0
        %v342 = vadd.f32 0.0, %v341
        %v343 = vpop.f32.mrb[0].mxu0
        %344 = vdwg.mxu0
        %vm345 = vcmask 52224
        %346 = vst.msk [vmem:[%s237] sm:$0xf] %vm345, %v342
        %p347 = scmp.lt.s32.totalorder %s20, 1
        %s348 = scalar_select %p347, %s20, 1
        %s349 = smul.addr %s348, 8
        %s350 = scalar_lea.vmem %s4, %s349
        %s351 = sand.u32 %s148, 1
        %s352 = scalar_lea.sflag [#allocation3], %s351
        %s353 = sand.u32 %s148, 1
        %s354 = smul.addr %s353, 4
        %s355 = scalar_lea.vmem [#allocation2], %s354
        // Predicated region
        $region37: #{tpu_custom_call.1} parent=35 // pred_check
          %p356 = pneg %p132
        $region38: #{tpu_custom_call.1} parent=35 // pred_check_branch
          %358 = sbr.rel (%p356) target = $region40
        $region39: #{tpu_custom_call.1} parent=35 // pred_region
          _
        $region40: #{tpu_custom_call.1} parent=35 // pred_fallthru
          _
        // Predicated region
        $region41: #{tpu_custom_call.1} parent=35 // pred_check
          %p359 = pneg %p158
        $region42: #{tpu_custom_call.1} parent=35 // pred_check_branch
          %361 = sbr.rel (%p359) target = $region44
        $region43: #{tpu_custom_call.1} parent=35 // pred_region
          %s363 = ssub.s32 64, 64
          %364 = vsyncadd %s352, %s363
          %s365 = smul.addr %s20, 64
          %s366 = scalar_lea.hbm %s5, %s365
          %s368 = sshll.u32 %s355, 4
          %s369 = int_to_ptr.vmem [resolvable:$true] %s368
          %371 = dma.vmem_to_hbm [thread:$0]  %s369, 64, %s366, %s352
        $region44: #{tpu_custom_call.1} parent=35 // pred_fallthru
          _
      $region36: #{tpu_custom_call.1} parent=5 // pred_fallthru
        _
      %p372 = scmp.le.s32.totalorder 2, %s15
      // Predicated region
      $region45: #{tpu_custom_call.1} parent=5 // pred_check
        %p373 = pneg %p372
      $region46: #{tpu_custom_call.1} parent=5 // pred_check_branch
        %375 = sbr.rel (%p373) target = $region48
      $region47: #{tpu_custom_call.1} parent=5 // pred_region
        %s376 = ssub.s32 %s15, 2
        // Predicated region
        $region49: #{tpu_custom_call.1} parent=47 // pred_check
          %p377 = pneg %p138
        $region50: #{tpu_custom_call.1} parent=47 // pred_check_branch
          %379 = sbr.rel (%p377) target = $region52
        $region51: #{tpu_custom_call.1} parent=47 // pred_region
          %p380 = scmp.lt.s32.totalorder %s21, 1
          %s381 = scalar_select %p380, %s21, 1
          %s382 = smul.addr %s381, 8
          %s383 = scalar_lea.vmem %s4, %s382
        $region52: #{tpu_custom_call.1} parent=47 // pred_fallthru
          _
        // Predicated region
        $region53: #{tpu_custom_call.1} parent=47 // pred_check
          %p384 = pneg %p164
        $region54: #{tpu_custom_call.1} parent=47 // pred_check_branch
          %386 = sbr.rel (%p384) target = $region56
        $region55: #{tpu_custom_call.1} parent=47 // pred_region
          %s387 = sand.u32 %s149, 1
          %s388 = scalar_lea.sflag [#allocation3], %s387
          %s389 = sand.u32 %s149, 1
          %s390 = smul.addr %s389, 4
          %s391 = scalar_lea.vmem [#allocation2], %s390
          %392 = dma.done %s388, 64
        $region56: #{tpu_custom_call.1} parent=47 // pred_fallthru
          _
      $region48: #{tpu_custom_call.1} parent=5 // pred_fallthru
        _
    $region6: #{tpu_custom_call.1} parent=1 // loop_footer
      %s19 = sadd.s32 1, %s15
    $region7: #{tpu_custom_call.1} parent=1 // loop_footer_branch
      %14 = sbr.rel target = $region3
    $region8: #{tpu_custom_call.1} parent=1 // loop_exit
      _
    %393 = vsyncpa [#allocation3], 1
    %s394 = scalar_lea.sflag [#allocation3], 1
    %395 = vsyncpa %s394, 1

</llo_original>
